<compile_context>
chip_gen: v7x
topology: tpu7x:2x2x1
jax: 0.10.0
libtpu: 0.0.40
codegen_flags: <defaults>
</compile_context>

<pallas_src>
import functools

import jax
import jax.numpy as jnp
from jax import lax
from jax.experimental import pallas as pl
from jax.experimental.pallas import tpu as pltpu

TOK_BLOCK = 512  # tokens gathered per grid step; amortizes ~0.35 us/step pipeline overhead


def _round_up(x, m):
    return (x + m - 1) // m * m


def _gather_kernel(ids_ref, tab_hbm, out_ref, buf, sem, *, tok_block):
    # ids_ref : SMEM (N_pad,) int32     -- all token ids (scalar-prefetched)
    # tab_hbm : HBM  (V, D)             -- embedding table, rows DMA'd on demand
    # out_ref : VMEM (tok_block, D)     -- output tile for this grid step
    # buf     : VMEM (2, tok_block, D)  -- double-buffered row-gather staging
    # sem     : DMA semaphores (2,)     -- one per staging slot
    t = pl.program_id(0)
    nt = pl.num_programs(0)
    slot = t % 2

    def issue_tile(tile_idx, slot_idx):
        base = tile_idx * tok_block

        def body(i, carry):
            row = ids_ref[base + i]
            pltpu.make_async_copy(
                tab_hbm.at[pl.ds(row, 1), :],
                buf.at[slot_idx, pl.ds(i, 1), :],
                sem.at[slot_idx],
            ).start()
            return carry

        lax.fori_loop(0, tok_block, body, 0)

    def wait_tile(slot_idx):
        def body(i, carry):
            # Descriptor shape matches the started copy; src index is irrelevant for wait.
            pltpu.make_async_copy(
                tab_hbm.at[pl.ds(0, 1), :],
                buf.at[slot_idx, pl.ds(i, 1), :],
                sem.at[slot_idx],
            ).wait()
            return carry

        lax.fori_loop(0, tok_block, body, 0)

    # Prime slot 0 on the first grid step.
    @pl.when(t == 0)
    def _():
        issue_tile(0, 0)

    # Prefetch next tile's rows into the other slot while this tile is consumed.
    @pl.when(t + 1 < nt)
    def _():
        issue_tile(t + 1, 1 - slot)

    wait_tile(slot)
    out_ref[...] = buf[slot]


def embedding_lookup(ids, table, tok_block=TOK_BLOCK):
    """ids: [B, S] integer ids, table: [V, D] -> [B, S, D] (same dtype as table).

    NOTE: choose D as a multiple of 128 for unmasked lane-dense output stores
    (any D is correct, just slower).
    """
    B, S = ids.shape
    V, D = table.shape
    N = B * S

    # Shrink the tile for tiny inputs (keep the sublane dim a multiple of 8).
    tok_block = min(tok_block, _round_up(N, 8))
    N_pad = _round_up(N, tok_block)
    n_blocks = N_pad // tok_block

    # Clamp ids so every DMA source is in-bounds (padded slots become row 0 and are
    # sliced off below). PyTorch would raise on out-of-range ids instead.
    ids_flat = jnp.clip(ids.reshape(N).astype(jnp.int32), 0, V - 1)
    if N_pad != N:
        ids_flat = jnp.pad(ids_flat, (0, N_pad - N))

    out_flat = pl.pallas_call(
        functools.partial(_gather_kernel, tok_block=tok_block),
        out_shape=jax.ShapeDtypeStruct((N_pad, D), table.dtype),
        grid_spec=pltpu.PrefetchScalarGridSpec(
            num_scalar_prefetch=1,                       # ids -> SMEM, drives the DMA gather
            grid=(n_blocks,),
            in_specs=[
                pl.BlockSpec(memory_space=pl.ANY),        # table stays in HBM; manual DMA
            ],
            out_specs=pl.BlockSpec((tok_block, D), lambda t, ids: (t, 0)),
            scratch_shapes=[
                pltpu.VMEM((2, tok_block, D), table.dtype),
                pltpu.SemaphoreType.DMA((2,)),
            ],
        ),
        compiler_params=pltpu.CompilerParams(
            # Cross-step double-buffer prefetch => keep the grid axis sequential.
            dimension_semantics=("arbitrary",),
            # Working set is O(tok_block * D); the default scoped-VMEM limit is ample on
            # v5e/v6e/v7x, so no vmem_limit_bytes override is needed.
        ),
    )(ids_flat, table)

    return out_flat[:N].reshape(B, S, D)


def make_embedding_params(vocab_size, emb_dim, padding_idx=3, seed=0):
    """Deterministic init matching nn.Embedding(vocab_size, emb_dim, padding_idx)."""
    key = jax.random.PRNGKey(seed)
    table = jax.random.normal(key, (vocab_size, emb_dim), dtype=jnp.float32)
    # nn.Embedding zeroes the padding_idx row at init
    table = table.at[padding_idx].set(0.0)
    return table


if __name__ == "__main__":
    VOCAB = 32
    EMB_DIM = 128
    PAD_IDX = 3
    B, S = 2, 8  # B*S = 16 tokens -> one 16-token tile

    table = make_embedding_params(VOCAB, EMB_DIM, padding_idx=PAD_IDX, seed=0)

    key = jax.random.PRNGKey(0)
    x = jax.random.randint(key, (B, S), 0, VOCAB, dtype=jnp.int32)
    # make sure the padding index appears at least once
    x = x.at[0, 0].set(PAD_IDX)

    out = embedding_lookup(x, table)
    out = jax.block_until_ready(out)

    # reference: plain gather
    ref = table[x]
    assert out.shape == (B, S, EMB_DIM)
    assert jnp.allclose(out, ref), "mismatch vs reference gather"
    assert jnp.allclose(out[0, 0], 0.0), "padding_idx row should be zeros"

    print("KERNEL_OK")
</pallas_src>

<mosaic_0001>
module attributes {stable_mosaic.version = 11 : i64} {
  func.func @_gather_kernel(%arg0: i32, %arg1: memref<16xi32, #tpu.memory_space<smem>>, %arg2: memref<32x128xf32, #tpu.memory_space<any>>, %arg3: memref<16x128xf32, #tpu.memory_space<vmem>>, %arg4: memref<2x16x128xf32, #tpu.memory_space<vmem>>, %arg5: memref<2x!tpu.dma_semaphore, #tpu.memory_space<semaphore_mem>>) attributes {dimension_semantics = [#tpu.dimension_semantics<arbitrary>], iteration_bounds = array<i64: 1>, scalar_prefetch = 1 : i64, scratch_operands = 2 : i64, tpu.core_type = #tpu.core_type<tc>, window_params = [{}, {transform_indices = @transform_1, window_bounds = array<i64: 16, 128>}]} {
    %c2_i32 = arith.constant 2 : i32
    %c0_i32 = arith.constant 0 : i32
    %0 = arith.cmpi eq, %c2_i32, %c0_i32 : i32
    %c1_i32 = arith.constant 1 : i32
    %1 = arith.select %0, %c1_i32, %c2_i32 : i32
    %2 = arith.remsi %arg0, %1 : i32
    %c0_i32_0 = arith.constant 0 : i32
    %3 = arith.cmpi ne, %2, %c0_i32_0 : i32
    %c0_i32_1 = arith.constant 0 : i32
    %4 = arith.cmpi slt, %2, %c0_i32_1 : i32
    %c0_i32_2 = arith.constant 0 : i32
    %5 = arith.cmpi slt, %1, %c0_i32_2 : i32
    %6 = arith.xori %4, %5 : i1
    %7 = arith.andi %6, %3 : i1
    %8 = arith.addi %2, %1 : i32
    %9 = arith.select %7, %8, %2 : i32
    %c0_i32_3 = arith.constant 0 : i32
    %10 = arith.cmpi eq, %arg0, %c0_i32_3 : i32
    %11 = arith.extui %10 : i1 to i32
    %c0_i32_4 = arith.constant 0 : i32
    %12 = arith.cmpi ne, %11, %c0_i32_4 : i32
    scf.if %12 {
      %c0_i32_14 = arith.constant 0 : i32
      %c16_i32_15 = arith.constant 16 : i32
      %22 = arith.addi %c0_i32_14, %c16_i32_15 : i32
      %c1_i32_16 = arith.constant 1 : i32
      scf.for %arg6 = %c0_i32_14 to %22 step %c1_i32_16  : i32 {
        %c0_i32_18 = arith.constant 0 : i32
        %23 = arith.addi %c0_i32_18, %arg6 : i32
        %24 = arith.index_cast %23 : i32 to index
        %25 = memref.load %arg1[%24] : memref<16xi32, #tpu.memory_space<smem>>
        %c0_i32_19 = arith.constant 0 : i32
        %c0_i32_20 = arith.constant 0 : i32
        %c0_i32_21 = arith.constant 0 : i32
        %26 = tpu.memref_slice %arg2[%25, %c0_i32_21] : memref<32x128xf32, #tpu.memory_space<any>> -> memref<1x128xf32, #tpu.memory_space<any>>
        %c0_i32_22 = arith.constant 0 : i32
        %27 = tpu.memref_slice %arg4[%c0_i32_19, %arg6, %c0_i32_22] : memref<2x16x128xf32, #tpu.memory_space<vmem>> -> memref<1x1x128xf32, #tpu.memory_space<vmem>>
        %28 = tpu.memref_squeeze %27 : memref<1x1x128xf32, #tpu.memory_space<vmem>> -> memref<1x128xf32, #tpu.memory_space<vmem>>
        %29 = tpu.memref_slice %arg5[%c0_i32_20] : memref<2x!tpu.dma_semaphore, #tpu.memory_space<semaphore_mem>> -> memref<1x!tpu.dma_semaphore, #tpu.memory_space<semaphore_mem>>
        %30 = tpu.memref_squeeze %29 : memref<1x!tpu.dma_semaphore, #tpu.memory_space<semaphore_mem>> -> memref<!tpu.dma_semaphore, #tpu.memory_space<semaphore_mem>>
        tpu.enqueue_dma source(%26 : memref<1x128xf32, #tpu.memory_space<any>>) target(%28 : memref<1x128xf32, #tpu.memory_space<vmem>>) target_semaphore(%30 : memref<!tpu.dma_semaphore, #tpu.memory_space<semaphore_mem>>)
      }
      %c16_i32_17 = arith.constant 16 : i32
    } else {
    }
    %c1_i32_5 = arith.constant 1 : i32
    %13 = arith.addi %arg0, %c1_i32_5 : i32
    %c1_i32_6 = arith.constant 1 : i32
    %14 = arith.cmpi slt, %13, %c1_i32_6 : i32
    %15 = arith.extui %14 : i1 to i32
    %c0_i32_7 = arith.constant 0 : i32
    %16 = arith.cmpi ne, %15, %c0_i32_7 : i32
    scf.if %16 {
      %c1_i32_14 = arith.constant 1 : i32
      %22 = arith.addi %arg0, %c1_i32_14 : i32
      %c1_i32_15 = arith.constant 1 : i32
      %23 = arith.subi %c1_i32_15, %9 : i32
      %c16_i32_16 = arith.constant 16 : i32
      %24 = arith.muli %22, %c16_i32_16 : i32
      %c0_i32_17 = arith.constant 0 : i32
      %c16_i32_18 = arith.constant 16 : i32
      %25 = arith.addi %c0_i32_17, %c16_i32_18 : i32
      %c1_i32_19 = arith.constant 1 : i32
      scf.for %arg6 = %c0_i32_17 to %25 step %c1_i32_19  : i32 {
        %26 = arith.addi %24, %arg6 : i32
        %27 = arith.index_cast %26 : i32 to index
        %28 = memref.load %arg1[%27] : memref<16xi32, #tpu.memory_space<smem>>
        %c0_i32_21 = arith.constant 0 : i32
        %29 = tpu.memref_slice %arg2[%28, %c0_i32_21] : memref<32x128xf32, #tpu.memory_space<any>> -> memref<1x128xf32, #tpu.memory_space<any>>
        %c0_i32_22 = arith.constant 0 : i32
        %30 = tpu.memref_slice %arg4[%23, %arg6, %c0_i32_22] : memref<2x16x128xf32, #tpu.memory_space<vmem>> -> memref<1x1x128xf32, #tpu.memory_space<vmem>>
        %31 = tpu.memref_squeeze %30 : memref<1x1x128xf32, #tpu.memory_space<vmem>> -> memref<1x128xf32, #tpu.memory_space<vmem>>
        %32 = tpu.memref_slice %arg5[%23] : memref<2x!tpu.dma_semaphore, #tpu.memory_space<semaphore_mem>> -> memref<1x!tpu.dma_semaphore, #tpu.memory_space<semaphore_mem>>
        %33 = tpu.memref_squeeze %32 : memref<1x!tpu.dma_semaphore, #tpu.memory_space<semaphore_mem>> -> memref<!tpu.dma_semaphore, #tpu.memory_space<semaphore_mem>>
        tpu.enqueue_dma source(%29 : memref<1x128xf32, #tpu.memory_space<any>>) target(%31 : memref<1x128xf32, #tpu.memory_space<vmem>>) target_semaphore(%33 : memref<!tpu.dma_semaphore, #tpu.memory_space<semaphore_mem>>)
      }
      %c16_i32_20 = arith.constant 16 : i32
    } else {
    }
    %c0_i32_8 = arith.constant 0 : i32
    %c16_i32 = arith.constant 16 : i32
    %17 = arith.addi %c0_i32_8, %c16_i32 : i32
    %c1_i32_9 = arith.constant 1 : i32
    scf.for %arg6 = %c0_i32_8 to %17 step %c1_i32_9  : i32 {
      %c0_i32_14 = arith.constant 0 : i32
      %c0_i32_15 = arith.constant 0 : i32
      %22 = tpu.memref_slice %arg2[%c0_i32_14, %c0_i32_15] : memref<32x128xf32, #tpu.memory_space<any>> -> memref<1x128xf32, #tpu.memory_space<any>>
      %c0_i32_16 = arith.constant 0 : i32
      %23 = tpu.memref_slice %arg4[%9, %arg6, %c0_i32_16] : memref<2x16x128xf32, #tpu.memory_space<vmem>> -> memref<1x1x128xf32, #tpu.memory_space<vmem>>
      %24 = tpu.memref_squeeze %23 : memref<1x1x128xf32, #tpu.memory_space<vmem>> -> memref<1x128xf32, #tpu.memory_space<vmem>>
      %25 = tpu.memref_slice %arg5[%9] : memref<2x!tpu.dma_semaphore, #tpu.memory_space<semaphore_mem>> -> memref<1x!tpu.dma_semaphore, #tpu.memory_space<semaphore_mem>>
      %26 = tpu.memref_squeeze %25 : memref<1x!tpu.dma_semaphore, #tpu.memory_space<semaphore_mem>> -> memref<!tpu.dma_semaphore, #tpu.memory_space<semaphore_mem>>
      tpu.wait_dma2 semaphore(%26 : memref<!tpu.dma_semaphore, #tpu.memory_space<semaphore_mem>>) src(%22 : memref<1x128xf32, #tpu.memory_space<any>>) dst(%24 : memref<1x128xf32, #tpu.memory_space<vmem>>)
    }
    %c16_i32_10 = arith.constant 16 : i32
    %18 = arith.index_cast %9 : i32 to index
    %c0 = arith.constant 0 : index
    %c0_11 = arith.constant 0 : index
    %19 = vector.load %arg4[%18, %c0, %c0_11] : memref<2x16x128xf32, #tpu.memory_space<vmem>>, vector<1x16x128xf32>
    %20 = vector.shape_cast %19 : vector<1x16x128xf32> to vector<16x128xf32>
    %c0_12 = arith.constant 0 : index
    %c0_13 = arith.constant 0 : index
    %21 = vector.load %arg3[%c0_12, %c0_13] : memref<16x128xf32, #tpu.memory_space<vmem>>, vector<16x128xf32>
    tpu.vector_store %arg3[%c0_12, %c0_13], %20 {strides = array<i32>} : memref<16x128xf32, #tpu.memory_space<vmem>>, vector<16x128xf32>,
    return
  }
  func.func @transform_1(%arg0: i32, %arg1: memref<16xi32, #tpu.memory_space<smem>>) -> (i32, i32) {
    %c0_i32 = arith.constant 0 : i32
    %c0_i32_0 = arith.constant 0 : i32
    return %arg0, %c0_i32 : i32, i32
  }
}

</mosaic_0001>

<llo_original>
// kernel: tpu_custom_call.1
$region0: #{tpu_custom_call.1}
  #allocation0 [shape = 'u32[]', space=smem, size = 0x4, offset = 0x4, fixed_abs, tag = 'smem constant byte address 0x4 - core index']
  #allocation1 [shape = 'u32[144,128]{1,0:T(1,128)}', space=vmem, size = 0x12000, scoped, tag = 'internal scratch']
  #allocation2 [shape = 'f32[2,16,128]{2,1,0:T(8,128)}', space=vmem, size = 0x4000, scoped, tag = 'scratch operand']
  #allocation3 [shape = 's32[2]{0}', space=sflag, size = 0x8, scoped, tag = 'scratch operand']
  #allocation4 [shape = 's32[1]{0}', space=sflag, size = 0x4, scoped, tag = 'scoped memory for tpu_custom_call.1']
  #allocation5 [shape = 'u8[512]{0}', space=smem, size = 0x200, scoped, tag = 'prefetched SMEM operand 0']
  #allocation8 [shape = 's32[]', space=sflag, size = 0x4, offset = 0, fixed_abs, tag = 'sflag constant byte address 0x0 - dummy sync flag']
  #allocation9 [shape = 's32[]', space=sflag, size = 0x4, offset = 0, fixed_abs, tag = 'sflag constant byte address 0x0 - dummy sync flag']
  #allocation10 [shape = 'u32[]', space=smem, size = 0x4, offset = 0x44, fixed_abs, tag = 'smem constant byte address 0x44 - assertion arg 0']
  #allocation11 [shape = 'u32[]', space=smem, size = 0x4, offset = 0x48, fixed_abs, tag = 'smem constant byte address 0x48 - assertion arg 1']
  #allocation12 [shape = 's32[]', space=sflag, size = 0x4, offset = 0, fixed_abs, tag = 'sflag constant byte address 0x0 - dummy sync flag']
  #allocation13 [shape = 's32[]', space=sflag, size = 0x4, offset = 0, fixed_abs, tag = 'sflag constant byte address 0x0 - dummy sync flag']
  %s0 = inlined_call_operand.hbm [shape: s32[16], index: 0, kind: input, shape index: {}]
  %s1 = inlined_call_operand.hbm [shape: f32[32,128], index: 1, kind: input, shape index: {}]
  %s2 = inlined_call_operand.hbm [shape: f32[16,128], index: 2, kind: output, shape index: {}]
  %s3 = sld [smem:[#allocation0]]
  $region47: #{tpu_custom_call.1} parent=0
    _
  %s5 = ssub.s32 1, %s3
  %s6 = scalar_select 0, %s5, %s3
  %8 = dma.hbm_to_smem %s0, 16, [#allocation5], [#allocation4]
  %9 = dma.done [#allocation4], 16
  %10 = sfence
  $region1: #{tpu_custom_call.1} parent=0
    #allocation6 [shape = 'u8[8192]{0}', space=vmem, size = 0x2000, scoped, tag = 'output window, operand 0, single buffered']
    #allocation7 [shape = 's32[1]{0}', space=sflag, size = 0x4, scoped, tag = 'scoped memory for tpu_custom_call.1']
    %11 = vsyncpa [#allocation7], 0
    %s12 = ssub.s32 0, 0
    %s13 = ssub.s32 0, 0
    %p14 = scmp.ne.s32.totalorder 0, 0
    %p15 = scmp.lt.s32.totalorder 0, 0
    %p16 = pnand %p15, %p14
    %p17 = pneg %p16
    %s18 = sadd.s32 0, 2
    %s19 = scalar_select %p17, %s18, 0
    %p20 = scmp.eq.s32.totalorder 0, 0
    // Predicated region
    $region2: #{tpu_custom_call.1} parent=1 // pred_check
      %p21 = pneg %p20
    $region3: #{tpu_custom_call.1} parent=1 // pred_check_branch
      %23 = sbr.rel (%p21) target = $region5
    $region4: #{tpu_custom_call.1} parent=1 // pred_region
      loop: start=0, step=1, limit=16
      $region6: #{tpu_custom_call.1} parent=4 // loop_pre_header
        _
      $region7: #{tpu_custom_call.1} parent=4 // loop_header
        %s25 = sphi 0, %s29
        %p26 = scmp.ge.s32.totalorder %s25, 16
      $region8: #{tpu_custom_call.1} parent=4 // loop_header_branch
        %28 = sbr.rel (%p26) target = $region12
      $region9: #{tpu_custom_call.1} parent=4 // loop_body
        %s30 = sld [smem:[#allocation5 + %s25]]
        %s31 = smul.addr %s30, 16
        %s32 = scalar_lea.hbm %s1, %s31
        %s33 = scalar_lea.vmem [#allocation2], %s25
        // Predicated region
        $region13: #{tpu_custom_call.1} parent=9 // pred_check
          _
        $region14: #{tpu_custom_call.1} parent=9 // pred_check_branch
          %35 = sbr.rel target = $region16
        $region15: #{tpu_custom_call.1} parent=9 // pred_region
          %36 = sst [smem:[#allocation10]] [#allocation9]
          %37 = sst [smem:[#allocation11]] [#allocation8]
        $region16: #{tpu_custom_call.1} parent=9 // pred_fallthru
          _
        %39 = shalt.err (0)
        %s41 = sshll.u32 %s33, 4
        %s42 = int_to_ptr.vmem [resolvable:$true] %s41
        %44 = dma.hbm_to_vmem [thread:$0]  %s32, 16, %s42, [#allocation3]
      $region10: #{tpu_custom_call.1} parent=4 // loop_footer
        %s29 = sadd.s32 1, %s25
      $region11: #{tpu_custom_call.1} parent=4 // loop_footer_branch
        %24 = sbr.rel target = $region7
      $region12: #{tpu_custom_call.1} parent=4 // loop_exit
        _
    $region5: #{tpu_custom_call.1} parent=1 // pred_fallthru
      _
    %s45 = sadd.s32 0, 1
    %p46 = scmp.lt.s32.totalorder %s45, 1
    // Predicated region
    $region17: #{tpu_custom_call.1} parent=1 // pred_check
      %p47 = pneg %p46
    $region18: #{tpu_custom_call.1} parent=1 // pred_check_branch
      %49 = sbr.rel (%p47) target = $region20
    $region19: #{tpu_custom_call.1} parent=1 // pred_region
      %s50 = ssub.s32 1, %s19
      %s51 = smul.u32 %s45, 16
      loop: start=0, step=1, limit=16
      $region21: #{tpu_custom_call.1} parent=19 // loop_pre_header
        _
      $region22: #{tpu_custom_call.1} parent=19 // loop_header
        %s53 = sphi 0, %s57
        %p54 = scmp.ge.s32.totalorder %s53, 16
      $region23: #{tpu_custom_call.1} parent=19 // loop_header_branch
        %56 = sbr.rel (%p54) target = $region27
      $region24: #{tpu_custom_call.1} parent=19 // loop_body
        %s58 = sadd.s32 %s51, %s53
        %s59 = sld [smem:[#allocation5 + %s58]]
        %s60 = smul.addr %s59, 16
        %s61 = scalar_lea.hbm %s1, %s60
        %s62 = smul.u32 %s50, 16
        %s63 = sadd.s32 %s53, %s62
        %s64 = scalar_lea.vmem [#allocation2], %s63
        %s65 = scalar_lea.sflag [#allocation3], %s50
        // Predicated region
        $region28: #{tpu_custom_call.1} parent=24 // pred_check
          _
        $region29: #{tpu_custom_call.1} parent=24 // pred_check_branch
          %67 = sbr.rel target = $region31
        $region30: #{tpu_custom_call.1} parent=24 // pred_region
          %68 = sst [smem:[#allocation10]] [#allocation13]
          %69 = sst [smem:[#allocation11]] [#allocation12]
        $region31: #{tpu_custom_call.1} parent=24 // pred_fallthru
          _
        %71 = shalt.err (0)
        %s73 = sshll.u32 %s64, 4
        %s74 = int_to_ptr.vmem [resolvable:$true] %s73
        %76 = dma.hbm_to_vmem [thread:$0]  %s61, 16, %s74, %s65
      $region25: #{tpu_custom_call.1} parent=19 // loop_footer
        %s57 = sadd.s32 1, %s53
      $region26: #{tpu_custom_call.1} parent=19 // loop_footer_branch
        %52 = sbr.rel target = $region22
      $region27: #{tpu_custom_call.1} parent=19 // loop_exit
        _
    $region20: #{tpu_custom_call.1} parent=1 // pred_fallthru
      _
    loop: start=0, step=1, limit=16
    $region32: #{tpu_custom_call.1} parent=1 // loop_pre_header
      _
    $region33: #{tpu_custom_call.1} parent=1 // loop_header
      %s78 = sphi 0, %s82
      %p79 = scmp.ge.s32.totalorder %s78, 16
    $region34: #{tpu_custom_call.1} parent=1 // loop_header_branch
      %81 = sbr.rel (%p79) target = $region38
    $region35: #{tpu_custom_call.1} parent=1 // loop_body
      %s83 = scalar_lea.sflag [#allocation3], %s19
      %s84 = smul.u32 1, 1
      %s85 = sshll.u32 %s84, 4
      %86 = dma.done %s83, %s85
    $region36: #{tpu_custom_call.1} parent=1 // loop_footer
      %s82 = sadd.s32 1, %s78
    $region37: #{tpu_custom_call.1} parent=1 // loop_footer_branch
      %77 = sbr.rel target = $region33
    $region38: #{tpu_custom_call.1} parent=1 // loop_exit
      _
    %s87 = smul.u32 %s19, 16
    %s88 = scalar_lea.vmem [#allocation2], %s87
    %v89 = vld [vmem:[%s88] sm:$0xff]
    %v90 = vld [vmem:[%s88 + $0x8] sm:$0xff]
    %91 = vst [vmem:[#allocation6] sm:$0xff] %v89
    %92 = vst [vmem:[#allocation6 + $0x8] sm:$0xff] %v90
    // Predicated region
    $region39: #{tpu_custom_call.1} parent=1 // pred_check
      _
    $region40: #{tpu_custom_call.1} parent=1 // pred_check_branch
      %94 = sbr.rel (0) target = $region42
    $region41: #{tpu_custom_call.1} parent=1 // pred_region
      %s96 = ssub.s32 256, 256
      %97 = vsyncadd [#allocation7], %s96
      %s98 = sshll.u32 [#allocation6], 4
      %s99 = int_to_ptr.vmem [resolvable:$true] %s98
      %104 = dma.vmem_to_hbm [thread:$0]  %s99, 256, %s2, [#allocation7], 128, 128, 8
    $region42: #{tpu_custom_call.1} parent=1 // pred_fallthru
      _
    // Predicated region
    $region43: #{tpu_custom_call.1} parent=1 // pred_check
      _
    $region44: #{tpu_custom_call.1} parent=1 // pred_check_branch
      %106 = sbr.rel (0) target = $region46
    $region45: #{tpu_custom_call.1} parent=1 // pred_region
      %107 = dma.done [#allocation7], 256
    $region46: #{tpu_custom_call.1} parent=1 // pred_fallthru
      _
    %108 = vsyncpa [#allocation7], 1
  %109 = vsyncmov [#allocation3]
  %s110 = vpop.sfrf %109
  %p111 = scmp.eq.s32.totalorder %s110, 0
  %p112 = pneg %p111
  %114 = shalt.err (%p112)
  %s115 = scalar_lea.sflag [#allocation3], 1
  %116 = vsyncmov %s115
  %s117 = vpop.sfrf %116
  %p118 = scmp.eq.s32.totalorder %s117, 0
  %p119 = pneg %p118
  %121 = shalt.err (%p119)

</llo_original>
